<compile_context>
chip_gen: v5e
topology: v5e:2x2
jax: 0.10.0
libtpu: 0.0.40
codegen_flags: <defaults>
</compile_context>

<pallas_src>
import functools

import jax
import jax.numpy as jnp
from jax.experimental import pallas as pl
from jax.experimental.pallas import tpu as pltpu


LEAKY_SLOPE = 0.2
BN_EPS = 1e-5


def _conv3x3s2_lrelu_bn_kernel(xp_ref, w_ref, b_ref, s_ref, t_ref, o_ref, *, wo):
    # xp_ref: (1, 4, Cin, P)  phase-packed input; phase p = 2*(h%2) + (w%2)
    #                         (0:ee, 1:eo, 2:oe, 3:oo); lane = oh*Wo + ow
    # w_ref : (Cout, Cin*9)   conv weights, lane index = ci*9 + kh*3 + kw
    # b_ref : (Cout, 1)       conv bias
    # s_ref : (Cout, 1)       folded inference-BatchNorm scale
    # t_ref : (Cout, 1)       folded inference-BatchNorm shift
    # o_ref : (1, Cout, P)    output, lane = oh*Wo + ow
    Cin = xp_ref.shape[2]
    P = o_ref.shape[2]

    # Hoisted pad=1 boundary masks (built once, shared by every channel/tap).
    lane = jax.lax.broadcasted_iota(jnp.int32, (1, P), 1)
    col_keep = (lane % wo) >= 1       # ow == 0 receives the zero left pad
    row_keep = lane >= wo             # oh == 0 receives the zero top pad

    def shift_right(v):               # result[oh, ow] = v[oh, ow-1], ow==0 -> 0
        return jnp.where(col_keep, pltpu.roll(v, shift=1, axis=1), 0.0)

    def shift_down(v):                # result[oh, ow] = v[oh-1, ow], oh==0 -> 0
        return jnp.where(row_keep, pltpu.roll(v, shift=wo, axis=1), 0.0)

    partials = []
    for ci in range(Cin):
        ee = xp_ref[0, 0, ci:ci + 1, :]       # (1, P) even row, even col
        eo = xp_ref[0, 1, ci:ci + 1, :]       # even row, odd col
        oe = xp_ref[0, 2, ci:ci + 1, :]       # odd row,  even col
        oo = xp_ref[0, 3, ci:ci + 1, :]       # odd row,  odd col
        oo_d = shift_down(oo)
        # Tap order t = kh*3 + kw (matches the flat weight layout).
        taps = (shift_right(oo_d), shift_down(oe), oo_d,      # kh = 0
                shift_right(eo),   ee,             eo,        # kh = 1
                shift_right(oo),   oe,             oo)        # kh = 2
        base = ci * 9
        # All Cout outputs at once: (Cout,1) weight column x (1,P) tap plane.
        p_acc = w_ref[:, base:base + 1] * taps[0]
        for t in range(1, 9):
            p_acc = p_acc + w_ref[:, base + t:base + t + 1] * taps[t]
        partials.append(p_acc)

    # Pairwise tree-sum of the independent per-input-channel chains.
    while len(partials) > 1:
        nxt = [partials[i] + partials[i + 1]
               for i in range(0, len(partials) - 1, 2)]
        if len(partials) % 2:
            nxt.append(partials[-1])
        partials = nxt
    acc = partials[0]                          # (Cout, P) f32

    acc = acc + b_ref[...]                                   # conv bias
    y = jnp.where(acc >= 0.0, acc, acc * LEAKY_SLOPE)        # LeakyReLU(0.2)
    y = y * s_ref[...] + t_ref[...]                          # eval-mode BN
    o_ref[0, :, :] = y.astype(o_ref.dtype)


def basic_block_conv_forward(x, conv_w, conv_b, bn_gamma, bn_beta,
                             bn_mean, bn_var):
    """x: (N, Cin, H, W) f32, NCHW.  Returns (N, Cout, H//2, W//2) f32."""
    N, Cin, H, W = x.shape
    Cout = conv_w.shape[0]
    assert conv_w.shape == (Cout, Cin, 3, 3)
    assert H % 2 == 0 and W % 2 == 0, "even spatial sizes only"
    # TODO(synk): odd H/W (stride-2 using the bottom/right pad row) would need
    # one extra zero row/col in the odd phase planes.
    Ho, Wo = H // 2, W // 2
    P = Ho * Wo

    x = x.astype(jnp.float32)
    # ONE XLA pass: stride-2 phase deinterleave + flatten spatial onto lanes.
    #   (N,Cin,H,W) -> (N,Cin,Ho,2,Wo,2) -> (N, rp, cp, Cin, Ho, Wo)
    #   -> (N, 4, Cin, Ho*Wo), phase p = 2*rp + cp.
    xp = x.reshape(N, Cin, Ho, 2, Wo, 2)
    xp = jnp.transpose(xp, (0, 3, 5, 1, 2, 4)).reshape(N, 4, Cin, P)

    # Fold eval-mode BatchNorm into per-channel scale/shift (after LeakyReLU).
    scale = bn_gamma * jax.lax.rsqrt(bn_var + BN_EPS)
    shift = bn_beta - bn_mean * scale

    w2 = conv_w.reshape(Cout, Cin * 9).astype(jnp.float32)   # (co, ci*9+kh*3+kw)
    b_col = conv_b.reshape(Cout, 1).astype(jnp.float32)
    s_col = scale.reshape(Cout, 1).astype(jnp.float32)
    t_col = shift.reshape(Cout, 1).astype(jnp.float32)

    kernel = functools.partial(_conv3x3s2_lrelu_bn_kernel, wo=Wo)

    flops = 2 * N * Cout * Cin * 9 * P
    bytes_accessed = 4 * (xp.size + N * Cout * P + w2.size + 3 * Cout)

    out = pl.pallas_call(
        kernel,
        out_shape=jax.ShapeDtypeStruct((N, Cout, P), jnp.float32),
        grid_spec=pltpu.PrefetchScalarGridSpec(
            num_scalar_prefetch=0,
            grid=(N,),
            in_specs=[
                pl.BlockSpec((1, 4, Cin, P), lambda n: (n, 0, 0, 0)),
                pl.BlockSpec((Cout, Cin * 9), lambda n: (0, 0)),
                pl.BlockSpec((Cout, 1), lambda n: (0, 0)),
                pl.BlockSpec((Cout, 1), lambda n: (0, 0)),
                pl.BlockSpec((Cout, 1), lambda n: (0, 0)),
            ],
            out_specs=pl.BlockSpec((1, Cout, P), lambda n: (n, 0, 0)),
        ),
        compiler_params=pltpu.CompilerParams(
            dimension_semantics=("parallel",)),
        cost_estimate=pl.CostEstimate(
            flops=flops, transcendentals=0, bytes_accessed=bytes_accessed),
    )(xp, w2, b_col, s_col, t_col)

    # Free reshape back to NCHW (lane order was oh*Wo + ow).
    return out.reshape(N, Cout, Ho, Wo)


if __name__ == "__main__":
    key = jax.random.PRNGKey(0)
    kx, kw, kb, kg, kbe, km, kv = jax.random.split(key, 7)

    dim, out_planes = 4, 4
    N, H, W = 2, 16, 16

    x = jax.random.normal(kx, (N, dim, H, W), jnp.float32)
    conv_w = jax.random.normal(kw, (out_planes, dim, 3, 3), jnp.float32) * 0.1
    conv_b = jax.random.normal(kb, (out_planes,), jnp.float32) * 0.1
    bn_gamma = 1.0 + 0.1 * jax.random.normal(kg, (out_planes,), jnp.float32)
    bn_beta = 0.1 * jax.random.normal(kbe, (out_planes,), jnp.float32)
    bn_mean = 0.1 * jax.random.normal(km, (out_planes,), jnp.float32)
    bn_var = 1.0 + 0.1 * jnp.abs(jax.random.normal(kv, (out_planes,), jnp.float32))

    fwd = jax.jit(basic_block_conv_forward)
    y = fwd(x, conv_w, conv_b, bn_gamma, bn_beta, bn_mean, bn_var)
    jax.block_until_ready(y)

    assert y.shape == (N, out_planes, H // 2, W // 2), y.shape
    assert y.dtype == jnp.float32

    # Pure-JAX reference (conv stride 2 pad 1 -> LeakyReLU(0.2) -> eval BN).
    ref = jax.lax.conv_general_dilated(
        x, conv_w, window_strides=(2, 2), padding=((1, 1), (1, 1)),
        dimension_numbers=("NCHW", "OIHW", "NCHW"),
        precision=jax.lax.Precision.HIGHEST)
    ref = ref + conv_b[None, :, None, None]
    ref = jnp.where(ref >= 0, ref, LEAKY_SLOPE * ref)
    rs = bn_gamma * jax.lax.rsqrt(bn_var + BN_EPS)
    ref = ref * rs[None, :, None, None] \
        + (bn_beta - bn_mean * rs)[None, :, None, None]
    err = float(jnp.max(jnp.abs(y - ref)))
    assert err < 1e-3, f"max abs err {err}"

    print("KERNEL_OK")
</pallas_src>

<mosaic_0001>
module attributes {stable_mosaic.version = 11 : i64} {
  func.func @_conv3x3s2_lrelu_bn_kernel(%arg0: i32, %arg1: memref<1x4x4x64xf32, #tpu.memory_space<vmem>>, %arg2: memref<4x36xf32, #tpu.memory_space<vmem>>, %arg3: memref<4x1xf32, #tpu.memory_space<vmem>>, %arg4: memref<4x1xf32, #tpu.memory_space<vmem>>, %arg5: memref<4x1xf32, #tpu.memory_space<vmem>>, %arg6: memref<1x4x64xf32, #tpu.memory_space<vmem>>) attributes {dimension_semantics = [#tpu.dimension_semantics<parallel>], iteration_bounds = array<i64: 2>, scalar_prefetch = 0 : i64, scratch_operands = 0 : i64, tpu.core_type = #tpu.core_type<tc>, window_params = [{transform_indices = @transform_0, window_bounds = array<i64: 1, 4, 4, 64>}, {pipeline_mode = #tpu.pipeline_mode<synchronous>, transform_indices = @transform_1, window_bounds = array<i64: 4, 36>}, {pipeline_mode = #tpu.pipeline_mode<synchronous>, transform_indices = @transform_2, window_bounds = array<i64: 4, 1>}, {pipeline_mode = #tpu.pipeline_mode<synchronous>, transform_indices = @transform_3, window_bounds = array<i64: 4, 1>}, {pipeline_mode = #tpu.pipeline_mode<synchronous>, transform_indices = @transform_4, window_bounds = array<i64: 4, 1>}, {transform_indices = @transform_5, window_bounds = array<i64: 1, 4, 64>}]} {
    %0 = tpu.iota {dimensions = array<i32: 1>} : vector<1x64xi32>
    %c8_i32 = arith.constant 8 : i32
    %c0_i32 = arith.constant 0 : i32
    %1 = arith.cmpi eq, %c8_i32, %c0_i32 : i32
    %c1_i32 = arith.constant 1 : i32
    %2 = arith.select %1, %c1_i32, %c8_i32 : i32
    %3 = vector.broadcast %2 : i32 to vector<1x64xi32>
    %4 = arith.remsi %0, %3 : vector<1x64xi32>
    %c0_i32_0 = arith.constant 0 : i32
    %5 = vector.broadcast %c0_i32_0 : i32 to vector<1x64xi32>
    %6 = arith.cmpi ne, %4, %5 : vector<1x64xi32>
    %c0_i32_1 = arith.constant 0 : i32
    %7 = vector.broadcast %c0_i32_1 : i32 to vector<1x64xi32>
    %8 = arith.cmpi slt, %4, %7 : vector<1x64xi32>
    %c0_i32_2 = arith.constant 0 : i32
    %9 = arith.cmpi slt, %2, %c0_i32_2 : i32
    %10 = vector.broadcast %9 : i1 to vector<1x64xi1>
    %11 = vector.broadcast %10 : vector<1x64xi1> to vector<1x64xi1>
    %12 = arith.xori %8, %11 : vector<1x64xi1>
    %13 = arith.andi %12, %6 : vector<1x64xi1>
    %14 = vector.broadcast %2 : i32 to vector<1x64xi32>
    %15 = arith.addi %4, %14 : vector<1x64xi32>
    %16 = arith.select %13, %15, %4 : vector<1x64xi1>, vector<1x64xi32>
    %c1_i32_3 = arith.constant 1 : i32
    %17 = vector.broadcast %c1_i32_3 : i32 to vector<1x64xi32>
    %18 = arith.cmpi sge, %16, %17 : vector<1x64xi32>
    %c8_i32_4 = arith.constant 8 : i32
    %19 = vector.broadcast %c8_i32_4 : i32 to vector<1x64xi32>
    %20 = arith.cmpi sge, %0, %19 : vector<1x64xi32>
    %c0 = arith.constant 0 : index
    %c0_5 = arith.constant 0 : index
    %c0_6 = arith.constant 0 : index
    %c0_7 = arith.constant 0 : index
    %21 = vector.load %arg1[%c0, %c0_5, %c0_6, %c0_7] : memref<1x4x4x64xf32, #tpu.memory_space<vmem>>, vector<1x1x1x64xf32>
    %22 = vector.shape_cast %21 : vector<1x1x1x64xf32> to vector<1x64xf32>
    %c0_8 = arith.constant 0 : index
    %c1 = arith.constant 1 : index
    %c0_9 = arith.constant 0 : index
    %c0_10 = arith.constant 0 : index
    %23 = vector.load %arg1[%c0_8, %c1, %c0_9, %c0_10] : memref<1x4x4x64xf32, #tpu.memory_space<vmem>>, vector<1x1x1x64xf32>
    %24 = vector.shape_cast %23 : vector<1x1x1x64xf32> to vector<1x64xf32>
    %c0_11 = arith.constant 0 : index
    %c2 = arith.constant 2 : index
    %c0_12 = arith.constant 0 : index
    %c0_13 = arith.constant 0 : index
    %25 = vector.load %arg1[%c0_11, %c2, %c0_12, %c0_13] : memref<1x4x4x64xf32, #tpu.memory_space<vmem>>, vector<1x1x1x64xf32>
    %26 = vector.shape_cast %25 : vector<1x1x1x64xf32> to vector<1x64xf32>
    %c0_14 = arith.constant 0 : index
    %c3 = arith.constant 3 : index
    %c0_15 = arith.constant 0 : index
    %c0_16 = arith.constant 0 : index
    %27 = vector.load %arg1[%c0_14, %c3, %c0_15, %c0_16] : memref<1x4x4x64xf32, #tpu.memory_space<vmem>>, vector<1x1x1x64xf32>
    %28 = vector.shape_cast %27 : vector<1x1x1x64xf32> to vector<1x64xf32>
    %c8_i32_17 = arith.constant 8 : i32
    %29 = tpu.dynamic_rotate %28 by %c8_i32_17 dim 1 : vector<1x64xf32>, i32 -> vector<1x64xf32>
    %cst = arith.constant 0.000000e+00 : f32
    %30 = vector.broadcast %cst : f32 to vector<1x64xf32>
    %31 = arith.select %20, %29, %30 : vector<1x64xi1>, vector<1x64xf32>
    %c1_i32_18 = arith.constant 1 : i32
    %32 = tpu.dynamic_rotate %31 by %c1_i32_18 dim 1 : vector<1x64xf32>, i32 -> vector<1x64xf32>
    %cst_19 = arith.constant 0.000000e+00 : f32
    %33 = vector.broadcast %cst_19 : f32 to vector<1x64xf32>
    %34 = arith.select %18, %32, %33 : vector<1x64xi1>, vector<1x64xf32>
    %c8_i32_20 = arith.constant 8 : i32
    %35 = tpu.dynamic_rotate %26 by %c8_i32_20 dim 1 : vector<1x64xf32>, i32 -> vector<1x64xf32>
    %cst_21 = arith.constant 0.000000e+00 : f32
    %36 = vector.broadcast %cst_21 : f32 to vector<1x64xf32>
    %37 = arith.select %20, %35, %36 : vector<1x64xi1>, vector<1x64xf32>
    %c1_i32_22 = arith.constant 1 : i32
    %38 = tpu.dynamic_rotate %24 by %c1_i32_22 dim 1 : vector<1x64xf32>, i32 -> vector<1x64xf32>
    %cst_23 = arith.constant 0.000000e+00 : f32
    %39 = vector.broadcast %cst_23 : f32 to vector<1x64xf32>
    %40 = arith.select %18, %38, %39 : vector<1x64xi1>, vector<1x64xf32>
    %c1_i32_24 = arith.constant 1 : i32
    %41 = tpu.dynamic_rotate %28 by %c1_i32_24 dim 1 : vector<1x64xf32>, i32 -> vector<1x64xf32>
    %cst_25 = arith.constant 0.000000e+00 : f32
    %42 = vector.broadcast %cst_25 : f32 to vector<1x64xf32>
    %43 = arith.select %18, %41, %42 : vector<1x64xi1>, vector<1x64xf32>
    %c0_26 = arith.constant 0 : index
    %c0_27 = arith.constant 0 : index
    %44 = vector.load %arg2[%c0_26, %c0_27] : memref<4x36xf32, #tpu.memory_space<vmem>>, vector<4x1xf32>
    %45 = vector.broadcast %44 : vector<4x1xf32> to vector<4x64xf32>
    %46 = vector.broadcast %34 : vector<1x64xf32> to vector<4x64xf32>
    %47 = arith.mulf %45, %46 : vector<4x64xf32>
    %c0_28 = arith.constant 0 : index
    %c1_29 = arith.constant 1 : index
    %48 = vector.load %arg2[%c0_28, %c1_29] : memref<4x36xf32, #tpu.memory_space<vmem>>, vector<4x1xf32>
    %49 = vector.broadcast %48 : vector<4x1xf32> to vector<4x64xf32>
    %50 = vector.broadcast %37 : vector<1x64xf32> to vector<4x64xf32>
    %51 = arith.mulf %49, %50 : vector<4x64xf32>
    %52 = arith.addf %47, %51 : vector<4x64xf32>
    %c0_30 = arith.constant 0 : index
    %c2_31 = arith.constant 2 : index
    %53 = vector.load %arg2[%c0_30, %c2_31] : memref<4x36xf32, #tpu.memory_space<vmem>>, vector<4x1xf32>
    %54 = vector.broadcast %53 : vector<4x1xf32> to vector<4x64xf32>
    %55 = vector.broadcast %31 : vector<1x64xf32> to vector<4x64xf32>
    %56 = arith.mulf %54, %55 : vector<4x64xf32>
    %57 = arith.addf %52, %56 : vector<4x64xf32>
    %c0_32 = arith.constant 0 : index
    %c3_33 = arith.constant 3 : index
    %58 = vector.load %arg2[%c0_32, %c3_33] : memref<4x36xf32, #tpu.memory_space<vmem>>, vector<4x1xf32>
    %59 = vector.broadcast %58 : vector<4x1xf32> to vector<4x64xf32>
    %60 = vector.broadcast %40 : vector<1x64xf32> to vector<4x64xf32>
    %61 = arith.mulf %59, %60 : vector<4x64xf32>
    %62 = arith.addf %57, %61 : vector<4x64xf32>
    %c0_34 = arith.constant 0 : index
    %c4 = arith.constant 4 : index
    %63 = vector.load %arg2[%c0_34, %c4] : memref<4x36xf32, #tpu.memory_space<vmem>>, vector<4x1xf32>
    %64 = vector.broadcast %63 : vector<4x1xf32> to vector<4x64xf32>
    %65 = vector.broadcast %22 : vector<1x64xf32> to vector<4x64xf32>
    %66 = arith.mulf %64, %65 : vector<4x64xf32>
    %67 = arith.addf %62, %66 : vector<4x64xf32>
    %c0_35 = arith.constant 0 : index
    %c5 = arith.constant 5 : index
    %68 = vector.load %arg2[%c0_35, %c5] : memref<4x36xf32, #tpu.memory_space<vmem>>, vector<4x1xf32>
    %69 = vector.broadcast %68 : vector<4x1xf32> to vector<4x64xf32>
    %70 = vector.broadcast %24 : vector<1x64xf32> to vector<4x64xf32>
    %71 = arith.mulf %69, %70 : vector<4x64xf32>
    %72 = arith.addf %67, %71 : vector<4x64xf32>
    %c0_36 = arith.constant 0 : index
    %c6 = arith.constant 6 : index
    %73 = vector.load %arg2[%c0_36, %c6] : memref<4x36xf32, #tpu.memory_space<vmem>>, vector<4x1xf32>
    %74 = vector.broadcast %73 : vector<4x1xf32> to vector<4x64xf32>
    %75 = vector.broadcast %43 : vector<1x64xf32> to vector<4x64xf32>
    %76 = arith.mulf %74, %75 : vector<4x64xf32>
    %77 = arith.addf %72, %76 : vector<4x64xf32>
    %c0_37 = arith.constant 0 : index
    %c7 = arith.constant 7 : index
    %78 = vector.load %arg2[%c0_37, %c7] : memref<4x36xf32, #tpu.memory_space<vmem>>, vector<4x1xf32>
    %79 = vector.broadcast %78 : vector<4x1xf32> to vector<4x64xf32>
    %80 = vector.broadcast %26 : vector<1x64xf32> to vector<4x64xf32>
    %81 = arith.mulf %79, %80 : vector<4x64xf32>
    %82 = arith.addf %77, %81 : vector<4x64xf32>
    %c0_38 = arith.constant 0 : index
    %c8 = arith.constant 8 : index
    %83 = vector.load %arg2[%c0_38, %c8] : memref<4x36xf32, #tpu.memory_space<vmem>>, vector<4x1xf32>
    %84 = vector.broadcast %83 : vector<4x1xf32> to vector<4x64xf32>
    %85 = vector.broadcast %28 : vector<1x64xf32> to vector<4x64xf32>
    %86 = arith.mulf %84, %85 : vector<4x64xf32>
    %87 = arith.addf %82, %86 : vector<4x64xf32>
    %c0_39 = arith.constant 0 : index
    %c0_40 = arith.constant 0 : index
    %c1_41 = arith.constant 1 : index
    %c0_42 = arith.constant 0 : index
    %88 = vector.load %arg1[%c0_39, %c0_40, %c1_41, %c0_42] : memref<1x4x4x64xf32, #tpu.memory_space<vmem>>, vector<1x1x1x64xf32>
    %89 = vector.shape_cast %88 : vector<1x1x1x64xf32> to vector<1x64xf32>
    %c0_43 = arith.constant 0 : index
    %c1_44 = arith.constant 1 : index
    %c1_45 = arith.constant 1 : index
    %c0_46 = arith.constant 0 : index
    %90 = vector.load %arg1[%c0_43, %c1_44, %c1_45, %c0_46] : memref<1x4x4x64xf32, #tpu.memory_space<vmem>>, vector<1x1x1x64xf32>
    %91 = vector.shape_cast %90 : vector<1x1x1x64xf32> to vector<1x64xf32>
    %c0_47 = arith.constant 0 : index
    %c2_48 = arith.constant 2 : index
    %c1_49 = arith.constant 1 : index
    %c0_50 = arith.constant 0 : index
    %92 = vector.load %arg1[%c0_47, %c2_48, %c1_49, %c0_50] : memref<1x4x4x64xf32, #tpu.memory_space<vmem>>, vector<1x1x1x64xf32>
    %93 = vector.shape_cast %92 : vector<1x1x1x64xf32> to vector<1x64xf32>
    %c0_51 = arith.constant 0 : index
    %c3_52 = arith.constant 3 : index
    %c1_53 = arith.constant 1 : index
    %c0_54 = arith.constant 0 : index
    %94 = vector.load %arg1[%c0_51, %c3_52, %c1_53, %c0_54] : memref<1x4x4x64xf32, #tpu.memory_space<vmem>>, vector<1x1x1x64xf32>
    %95 = vector.shape_cast %94 : vector<1x1x1x64xf32> to vector<1x64xf32>
    %c8_i32_55 = arith.constant 8 : i32
    %96 = tpu.dynamic_rotate %95 by %c8_i32_55 dim 1 : vector<1x64xf32>, i32 -> vector<1x64xf32>
    %cst_56 = arith.constant 0.000000e+00 : f32
    %97 = vector.broadcast %cst_56 : f32 to vector<1x64xf32>
    %98 = arith.select %20, %96, %97 : vector<1x64xi1>, vector<1x64xf32>
    %c1_i32_57 = arith.constant 1 : i32
    %99 = tpu.dynamic_rotate %98 by %c1_i32_57 dim 1 : vector<1x64xf32>, i32 -> vector<1x64xf32>
    %cst_58 = arith.constant 0.000000e+00 : f32
    %100 = vector.broadcast %cst_58 : f32 to vector<1x64xf32>
    %101 = arith.select %18, %99, %100 : vector<1x64xi1>, vector<1x64xf32>
    %c8_i32_59 = arith.constant 8 : i32
    %102 = tpu.dynamic_rotate %93 by %c8_i32_59 dim 1 : vector<1x64xf32>, i32 -> vector<1x64xf32>
    %cst_60 = arith.constant 0.000000e+00 : f32
    %103 = vector.broadcast %cst_60 : f32 to vector<1x64xf32>
    %104 = arith.select %20, %102, %103 : vector<1x64xi1>, vector<1x64xf32>
    %c1_i32_61 = arith.constant 1 : i32
    %105 = tpu.dynamic_rotate %91 by %c1_i32_61 dim 1 : vector<1x64xf32>, i32 -> vector<1x64xf32>
    %cst_62 = arith.constant 0.000000e+00 : f32
    %106 = vector.broadcast %cst_62 : f32 to vector<1x64xf32>
    %107 = arith.select %18, %105, %106 : vector<1x64xi1>, vector<1x64xf32>
    %c1_i32_63 = arith.constant 1 : i32
    %108 = tpu.dynamic_rotate %95 by %c1_i32_63 dim 1 : vector<1x64xf32>, i32 -> vector<1x64xf32>
    %cst_64 = arith.constant 0.000000e+00 : f32
    %109 = vector.broadcast %cst_64 : f32 to vector<1x64xf32>
    %110 = arith.select %18, %108, %109 : vector<1x64xi1>, vector<1x64xf32>
    %c0_65 = arith.constant 0 : index
    %c9 = arith.constant 9 : index
    %111 = vector.load %arg2[%c0_65, %c9] : memref<4x36xf32, #tpu.memory_space<vmem>>, vector<4x1xf32>
    %112 = vector.broadcast %111 : vector<4x1xf32> to vector<4x64xf32>
    %113 = vector.broadcast %101 : vector<1x64xf32> to vector<4x64xf32>
    %114 = arith.mulf %112, %113 : vector<4x64xf32>
    %c0_66 = arith.constant 0 : index
    %c10 = arith.constant 10 : index
    %115 = vector.load %arg2[%c0_66, %c10] : memref<4x36xf32, #tpu.memory_space<vmem>>, vector<4x1xf32>
    %116 = vector.broadcast %115 : vector<4x1xf32> to vector<4x64xf32>
    %117 = vector.broadcast %104 : vector<1x64xf32> to vector<4x64xf32>
    %118 = arith.mulf %116, %117 : vector<4x64xf32>
    %119 = arith.addf %114, %118 : vector<4x64xf32>
    %c0_67 = arith.constant 0 : index
    %c11 = arith.constant 11 : index
    %120 = vector.load %arg2[%c0_67, %c11] : memref<4x36xf32, #tpu.memory_space<vmem>>, vector<4x1xf32>
    %121 = vector.broadcast %120 : vector<4x1xf32> to vector<4x64xf32>
    %122 = vector.broadcast %98 : vector<1x64xf32> to vector<4x64xf32>
    %123 = arith.mulf %121, %122 : vector<4x64xf32>
    %124 = arith.addf %119, %123 : vector<4x64xf32>
    %c0_68 = arith.constant 0 : index
    %c12 = arith.constant 12 : index
    %125 = vector.load %arg2[%c0_68, %c12] : memref<4x36xf32, #tpu.memory_space<vmem>>, vector<4x1xf32>
    %126 = vector.broadcast %125 : vector<4x1xf32> to vector<4x64xf32>
    %127 = vector.broadcast %107 : vector<1x64xf32> to vector<4x64xf32>
    %128 = arith.mulf %126, %127 : vector<4x64xf32>
    %129 = arith.addf %124, %128 : vector<4x64xf32>
    %c0_69 = arith.constant 0 : index
    %c13 = arith.constant 13 : index
    %130 = vector.load %arg2[%c0_69, %c13] : memref<4x36xf32, #tpu.memory_space<vmem>>, vector<4x1xf32>
    %131 = vector.broadcast %130 : vector<4x1xf32> to vector<4x64xf32>
    %132 = vector.broadcast %89 : vector<1x64xf32> to vector<4x64xf32>
    %133 = arith.mulf %131, %132 : vector<4x64xf32>
    %134 = arith.addf %129, %133 : vector<4x64xf32>
    %c0_70 = arith.constant 0 : index
    %c14 = arith.constant 14 : index
    %135 = vector.load %arg2[%c0_70, %c14] : memref<4x36xf32, #tpu.memory_space<vmem>>, vector<4x1xf32>
    %136 = vector.broadcast %135 : vector<4x1xf32> to vector<4x64xf32>
    %137 = vector.broadcast %91 : vector<1x64xf32> to vector<4x64xf32>
    %138 = arith.mulf %136, %137 : vector<4x64xf32>
    %139 = arith.addf %134, %138 : vector<4x64xf32>
    %c0_71 = arith.constant 0 : index
    %c15 = arith.constant 15 : index
    %140 = vector.load %arg2[%c0_71, %c15] : memref<4x36xf32, #tpu.memory_space<vmem>>, vector<4x1xf32>
    %141 = vector.broadcast %140 : vector<4x1xf32> to vector<4x64xf32>
    %142 = vector.broadcast %110 : vector<1x64xf32> to vector<4x64xf32>
    %143 = arith.mulf %141, %142 : vector<4x64xf32>
    %144 = arith.addf %139, %143 : vector<4x64xf32>
    %c0_72 = arith.constant 0 : index
    %c16 = arith.constant 16 : index
    %145 = vector.load %arg2[%c0_72, %c16] : memref<4x36xf32, #tpu.memory_space<vmem>>, vector<4x1xf32>
    %146 = vector.broadcast %145 : vector<4x1xf32> to vector<4x64xf32>
    %147 = vector.broadcast %93 : vector<1x64xf32> to vector<4x64xf32>
    %148 = arith.mulf %146, %147 : vector<4x64xf32>
    %149 = arith.addf %144, %148 : vector<4x64xf32>
    %c0_73 = arith.constant 0 : index
    %c17 = arith.constant 17 : index
    %150 = vector.load %arg2[%c0_73, %c17] : memref<4x36xf32, #tpu.memory_space<vmem>>, vector<4x1xf32>
    %151 = vector.broadcast %150 : vector<4x1xf32> to vector<4x64xf32>
    %152 = vector.broadcast %95 : vector<1x64xf32> to vector<4x64xf32>
    %153 = arith.mulf %151, %152 : vector<4x64xf32>
    %154 = arith.addf %149, %153 : vector<4x64xf32>
    %c0_74 = arith.constant 0 : index
    %c0_75 = arith.constant 0 : index
    %c2_76 = arith.constant 2 : index
    %c0_77 = arith.constant 0 : index
    %155 = vector.load %arg1[%c0_74, %c0_75, %c2_76, %c0_77] : memref<1x4x4x64xf32, #tpu.memory_space<vmem>>, vector<1x1x1x64xf32>
    %156 = vector.shape_cast %155 : vector<1x1x1x64xf32> to vector<1x64xf32>
    %c0_78 = arith.constant 0 : index
    %c1_79 = arith.constant 1 : index
    %c2_80 = arith.constant 2 : index
    %c0_81 = arith.constant 0 : index
    %157 = vector.load %arg1[%c0_78, %c1_79, %c2_80, %c0_81] : memref<1x4x4x64xf32, #tpu.memory_space<vmem>>, vector<1x1x1x64xf32>
    %158 = vector.shape_cast %157 : vector<1x1x1x64xf32> to vector<1x64xf32>
    %c0_82 = arith.constant 0 : index
    %c2_83 = arith.constant 2 : index
    %c2_84 = arith.constant 2 : index
    %c0_85 = arith.constant 0 : index
    %159 = vector.load %arg1[%c0_82, %c2_83, %c2_84, %c0_85] : memref<1x4x4x64xf32, #tpu.memory_space<vmem>>, vector<1x1x1x64xf32>
    %160 = vector.shape_cast %159 : vector<1x1x1x64xf32> to vector<1x64xf32>
    %c0_86 = arith.constant 0 : index
    %c3_87 = arith.constant 3 : index
    %c2_88 = arith.constant 2 : index
    %c0_89 = arith.constant 0 : index
    %161 = vector.load %arg1[%c0_86, %c3_87, %c2_88, %c0_89] : memref<1x4x4x64xf32, #tpu.memory_space<vmem>>, vector<1x1x1x64xf32>
    %162 = vector.shape_cast %161 : vector<1x1x1x64xf32> to vector<1x64xf32>
    %c8_i32_90 = arith.constant 8 : i32
    %163 = tpu.dynamic_rotate %162 by %c8_i32_90 dim 1 : vector<1x64xf32>, i32 -> vector<1x64xf32>
    %cst_91 = arith.constant 0.000000e+00 : f32
    %164 = vector.broadcast %cst_91 : f32 to vector<1x64xf32>
    %165 = arith.select %20, %163, %164 : vector<1x64xi1>, vector<1x64xf32>
    %c1_i32_92 = arith.constant 1 : i32
    %166 = tpu.dynamic_rotate %165 by %c1_i32_92 dim 1 : vector<1x64xf32>, i32 -> vector<1x64xf32>
    %cst_93 = arith.constant 0.000000e+00 : f32
    %167 = vector.broadcast %cst_93 : f32 to vector<1x64xf32>
    %168 = arith.select %18, %166, %167 : vector<1x64xi1>, vector<1x64xf32>
    %c8_i32_94 = arith.constant 8 : i32
    %169 = tpu.dynamic_rotate %160 by %c8_i32_94 dim 1 : vector<1x64xf32>, i32 -> vector<1x64xf32>
    %cst_95 = arith.constant 0.000000e+00 : f32
    %170 = vector.broadcast %cst_95 : f32 to vector<1x64xf32>
    %171 = arith.select %20, %169, %170 : vector<1x64xi1>, vector<1x64xf32>
    %c1_i32_96 = arith.constant 1 : i32
    %172 = tpu.dynamic_rotate %158 by %c1_i32_96 dim 1 : vector<1x64xf32>, i32 -> vector<1x64xf32>
    %cst_97 = arith.constant 0.000000e+00 : f32
    %173 = vector.broadcast %cst_97 : f32 to vector<1x64xf32>
    %174 = arith.select %18, %172, %173 : vector<1x64xi1>, vector<1x64xf32>
    %c1_i32_98 = arith.constant 1 : i32
    %175 = tpu.dynamic_rotate %162 by %c1_i32_98 dim 1 : vector<1x64xf32>, i32 -> vector<1x64xf32>
    %cst_99 = arith.constant 0.000000e+00 : f32
    %176 = vector.broadcast %cst_99 : f32 to vector<1x64xf32>
    %177 = arith.select %18, %175, %176 : vector<1x64xi1>, vector<1x64xf32>
    %c0_100 = arith.constant 0 : index
    %c18 = arith.constant 18 : index
    %178 = vector.load %arg2[%c0_100, %c18] : memref<4x36xf32, #tpu.memory_space<vmem>>, vector<4x1xf32>
    %179 = vector.broadcast %178 : vector<4x1xf32> to vector<4x64xf32>
    %180 = vector.broadcast %168 : vector<1x64xf32> to vector<4x64xf32>
    %181 = arith.mulf %179, %180 : vector<4x64xf32>
    %c0_101 = arith.constant 0 : index
    %c19 = arith.constant 19 : index
    %182 = vector.load %arg2[%c0_101, %c19] : memref<4x36xf32, #tpu.memory_space<vmem>>, vector<4x1xf32>
    %183 = vector.broadcast %182 : vector<4x1xf32> to vector<4x64xf32>
    %184 = vector.broadcast %171 : vector<1x64xf32> to vector<4x64xf32>
    %185 = arith.mulf %183, %184 : vector<4x64xf32>
    %186 = arith.addf %181, %185 : vector<4x64xf32>
    %c0_102 = arith.constant 0 : index
    %c20 = arith.constant 20 : index
    %187 = vector.load %arg2[%c0_102, %c20] : memref<4x36xf32, #tpu.memory_space<vmem>>, vector<4x1xf32>
    %188 = vector.broadcast %187 : vector<4x1xf32> to vector<4x64xf32>
    %189 = vector.broadcast %165 : vector<1x64xf32> to vector<4x64xf32>
    %190 = arith.mulf %188, %189 : vector<4x64xf32>
    %191 = arith.addf %186, %190 : vector<4x64xf32>
    %c0_103 = arith.constant 0 : index
    %c21 = arith.constant 21 : index
    %192 = vector.load %arg2[%c0_103, %c21] : memref<4x36xf32, #tpu.memory_space<vmem>>, vector<4x1xf32>
    %193 = vector.broadcast %192 : vector<4x1xf32> to vector<4x64xf32>
    %194 = vector.broadcast %174 : vector<1x64xf32> to vector<4x64xf32>
    %195 = arith.mulf %193, %194 : vector<4x64xf32>
    %196 = arith.addf %191, %195 : vector<4x64xf32>
    %c0_104 = arith.constant 0 : index
    %c22 = arith.constant 22 : index
    %197 = vector.load %arg2[%c0_104, %c22] : memref<4x36xf32, #tpu.memory_space<vmem>>, vector<4x1xf32>
    %198 = vector.broadcast %197 : vector<4x1xf32> to vector<4x64xf32>
    %199 = vector.broadcast %156 : vector<1x64xf32> to vector<4x64xf32>
    %200 = arith.mulf %198, %199 : vector<4x64xf32>
    %201 = arith.addf %196, %200 : vector<4x64xf32>
    %c0_105 = arith.constant 0 : index
    %c23 = arith.constant 23 : index
    %202 = vector.load %arg2[%c0_105, %c23] : memref<4x36xf32, #tpu.memory_space<vmem>>, vector<4x1xf32>
    %203 = vector.broadcast %202 : vector<4x1xf32> to vector<4x64xf32>
    %204 = vector.broadcast %158 : vector<1x64xf32> to vector<4x64xf32>
    %205 = arith.mulf %203, %204 : vector<4x64xf32>
    %206 = arith.addf %201, %205 : vector<4x64xf32>
    %c0_106 = arith.constant 0 : index
    %c24 = arith.constant 24 : index
    %207 = vector.load %arg2[%c0_106, %c24] : memref<4x36xf32, #tpu.memory_space<vmem>>, vector<4x1xf32>
    %208 = vector.broadcast %207 : vector<4x1xf32> to vector<4x64xf32>
    %209 = vector.broadcast %177 : vector<1x64xf32> to vector<4x64xf32>
    %210 = arith.mulf %208, %209 : vector<4x64xf32>
    %211 = arith.addf %206, %210 : vector<4x64xf32>
    %c0_107 = arith.constant 0 : index
    %c25 = arith.constant 25 : index
    %212 = vector.load %arg2[%c0_107, %c25] : memref<4x36xf32, #tpu.memory_space<vmem>>, vector<4x1xf32>
    %213 = vector.broadcast %212 : vector<4x1xf32> to vector<4x64xf32>
    %214 = vector.broadcast %160 : vector<1x64xf32> to vector<4x64xf32>
    %215 = arith.mulf %213, %214 : vector<4x64xf32>
    %216 = arith.addf %211, %215 : vector<4x64xf32>
    %c0_108 = arith.constant 0 : index
    %c26 = arith.constant 26 : index
    %217 = vector.load %arg2[%c0_108, %c26] : memref<4x36xf32, #tpu.memory_space<vmem>>, vector<4x1xf32>
    %218 = vector.broadcast %217 : vector<4x1xf32> to vector<4x64xf32>
    %219 = vector.broadcast %162 : vector<1x64xf32> to vector<4x64xf32>
    %220 = arith.mulf %218, %219 : vector<4x64xf32>
    %221 = arith.addf %216, %220 : vector<4x64xf32>
    %c0_109 = arith.constant 0 : index
    %c0_110 = arith.constant 0 : index
    %c3_111 = arith.constant 3 : index
    %c0_112 = arith.constant 0 : index
    %222 = vector.load %arg1[%c0_109, %c0_110, %c3_111, %c0_112] : memref<1x4x4x64xf32, #tpu.memory_space<vmem>>, vector<1x1x1x64xf32>
    %223 = vector.shape_cast %222 : vector<1x1x1x64xf32> to vector<1x64xf32>
    %c0_113 = arith.constant 0 : index
    %c1_114 = arith.constant 1 : index
    %c3_115 = arith.constant 3 : index
    %c0_116 = arith.constant 0 : index
    %224 = vector.load %arg1[%c0_113, %c1_114, %c3_115, %c0_116] : memref<1x4x4x64xf32, #tpu.memory_space<vmem>>, vector<1x1x1x64xf32>
    %225 = vector.shape_cast %224 : vector<1x1x1x64xf32> to vector<1x64xf32>
    %c0_117 = arith.constant 0 : index
    %c2_118 = arith.constant 2 : index
    %c3_119 = arith.constant 3 : index
    %c0_120 = arith.constant 0 : index
    %226 = vector.load %arg1[%c0_117, %c2_118, %c3_119, %c0_120] : memref<1x4x4x64xf32, #tpu.memory_space<vmem>>, vector<1x1x1x64xf32>
    %227 = vector.shape_cast %226 : vector<1x1x1x64xf32> to vector<1x64xf32>
    %c0_121 = arith.constant 0 : index
    %c3_122 = arith.constant 3 : index
    %c3_123 = arith.constant 3 : index
    %c0_124 = arith.constant 0 : index
    %228 = vector.load %arg1[%c0_121, %c3_122, %c3_123, %c0_124] : memref<1x4x4x64xf32, #tpu.memory_space<vmem>>, vector<1x1x1x64xf32>
    %229 = vector.shape_cast %228 : vector<1x1x1x64xf32> to vector<1x64xf32>
    %c8_i32_125 = arith.constant 8 : i32
    %230 = tpu.dynamic_rotate %229 by %c8_i32_125 dim 1 : vector<1x64xf32>, i32 -> vector<1x64xf32>
    %cst_126 = arith.constant 0.000000e+00 : f32
    %231 = vector.broadcast %cst_126 : f32 to vector<1x64xf32>
    %232 = arith.select %20, %230, %231 : vector<1x64xi1>, vector<1x64xf32>
    %c1_i32_127 = arith.constant 1 : i32
    %233 = tpu.dynamic_rotate %232 by %c1_i32_127 dim 1 : vector<1x64xf32>, i32 -> vector<1x64xf32>
    %cst_128 = arith.constant 0.000000e+00 : f32
    %234 = vector.broadcast %cst_128 : f32 to vector<1x64xf32>
    %235 = arith.select %18, %233, %234 : vector<1x64xi1>, vector<1x64xf32>
    %c8_i32_129 = arith.constant 8 : i32
    %236 = tpu.dynamic_rotate %227 by %c8_i32_129 dim 1 : vector<1x64xf32>, i32 -> vector<1x64xf32>
    %cst_130 = arith.constant 0.000000e+00 : f32
    %237 = vector.broadcast %cst_130 : f32 to vector<1x64xf32>
    %238 = arith.select %20, %236, %237 : vector<1x64xi1>, vector<1x64xf32>
    %c1_i32_131 = arith.constant 1 : i32
    %239 = tpu.dynamic_rotate %225 by %c1_i32_131 dim 1 : vector<1x64xf32>, i32 -> vector<1x64xf32>
    %cst_132 = arith.constant 0.000000e+00 : f32
    %240 = vector.broadcast %cst_132 : f32 to vector<1x64xf32>
    %241 = arith.select %18, %239, %240 : vector<1x64xi1>, vector<1x64xf32>
    %c1_i32_133 = arith.constant 1 : i32
    %242 = tpu.dynamic_rotate %229 by %c1_i32_133 dim 1 : vector<1x64xf32>, i32 -> vector<1x64xf32>
    %cst_134 = arith.constant 0.000000e+00 : f32
    %243 = vector.broadcast %cst_134 : f32 to vector<1x64xf32>
    %244 = arith.select %18, %242, %243 : vector<1x64xi1>, vector<1x64xf32>
    %c0_135 = arith.constant 0 : index
    %c27 = arith.constant 27 : index
    %245 = vector.load %arg2[%c0_135, %c27] : memref<4x36xf32, #tpu.memory_space<vmem>>, vector<4x1xf32>
    %246 = vector.broadcast %245 : vector<4x1xf32> to vector<4x64xf32>
    %247 = vector.broadcast %235 : vector<1x64xf32> to vector<4x64xf32>
    %248 = arith.mulf %246, %247 : vector<4x64xf32>
    %c0_136 = arith.constant 0 : index
    %c28 = arith.constant 28 : index
    %249 = vector.load %arg2[%c0_136, %c28] : memref<4x36xf32, #tpu.memory_space<vmem>>, vector<4x1xf32>
    %250 = vector.broadcast %249 : vector<4x1xf32> to vector<4x64xf32>
    %251 = vector.broadcast %238 : vector<1x64xf32> to vector<4x64xf32>
    %252 = arith.mulf %250, %251 : vector<4x64xf32>
    %253 = arith.addf %248, %252 : vector<4x64xf32>
    %c0_137 = arith.constant 0 : index
    %c29 = arith.constant 29 : index
    %254 = vector.load %arg2[%c0_137, %c29] : memref<4x36xf32, #tpu.memory_space<vmem>>, vector<4x1xf32>
    %255 = vector.broadcast %254 : vector<4x1xf32> to vector<4x64xf32>
    %256 = vector.broadcast %232 : vector<1x64xf32> to vector<4x64xf32>
    %257 = arith.mulf %255, %256 : vector<4x64xf32>
    %258 = arith.addf %253, %257 : vector<4x64xf32>
    %c0_138 = arith.constant 0 : index
    %c30 = arith.constant 30 : index
    %259 = vector.load %arg2[%c0_138, %c30] : memref<4x36xf32, #tpu.memory_space<vmem>>, vector<4x1xf32>
    %260 = vector.broadcast %259 : vector<4x1xf32> to vector<4x64xf32>
    %261 = vector.broadcast %241 : vector<1x64xf32> to vector<4x64xf32>
    %262 = arith.mulf %260, %261 : vector<4x64xf32>
    %263 = arith.addf %258, %262 : vector<4x64xf32>
    %c0_139 = arith.constant 0 : index
    %c31 = arith.constant 31 : index
    %264 = vector.load %arg2[%c0_139, %c31] : memref<4x36xf32, #tpu.memory_space<vmem>>, vector<4x1xf32>
    %265 = vector.broadcast %264 : vector<4x1xf32> to vector<4x64xf32>
    %266 = vector.broadcast %223 : vector<1x64xf32> to vector<4x64xf32>
    %267 = arith.mulf %265, %266 : vector<4x64xf32>
    %268 = arith.addf %263, %267 : vector<4x64xf32>
    %c0_140 = arith.constant 0 : index
    %c32 = arith.constant 32 : index
    %269 = vector.load %arg2[%c0_140, %c32] : memref<4x36xf32, #tpu.memory_space<vmem>>, vector<4x1xf32>
    %270 = vector.broadcast %269 : vector<4x1xf32> to vector<4x64xf32>
    %271 = vector.broadcast %225 : vector<1x64xf32> to vector<4x64xf32>
    %272 = arith.mulf %270, %271 : vector<4x64xf32>
    %273 = arith.addf %268, %272 : vector<4x64xf32>
    %c0_141 = arith.constant 0 : index
    %c33 = arith.constant 33 : index
    %274 = vector.load %arg2[%c0_141, %c33] : memref<4x36xf32, #tpu.memory_space<vmem>>, vector<4x1xf32>
    %275 = vector.broadcast %274 : vector<4x1xf32> to vector<4x64xf32>
    %276 = vector.broadcast %244 : vector<1x64xf32> to vector<4x64xf32>
    %277 = arith.mulf %275, %276 : vector<4x64xf32>
    %278 = arith.addf %273, %277 : vector<4x64xf32>
    %c0_142 = arith.constant 0 : index
    %c34 = arith.constant 34 : index
    %279 = vector.load %arg2[%c0_142, %c34] : memref<4x36xf32, #tpu.memory_space<vmem>>, vector<4x1xf32>
    %280 = vector.broadcast %279 : vector<4x1xf32> to vector<4x64xf32>
    %281 = vector.broadcast %227 : vector<1x64xf32> to vector<4x64xf32>
    %282 = arith.mulf %280, %281 : vector<4x64xf32>
    %283 = arith.addf %278, %282 : vector<4x64xf32>
    %c0_143 = arith.constant 0 : index
    %c35 = arith.constant 35 : index
    %284 = vector.load %arg2[%c0_143, %c35] : memref<4x36xf32, #tpu.memory_space<vmem>>, vector<4x1xf32>
    %285 = vector.broadcast %284 : vector<4x1xf32> to vector<4x64xf32>
    %286 = vector.broadcast %229 : vector<1x64xf32> to vector<4x64xf32>
    %287 = arith.mulf %285, %286 : vector<4x64xf32>
    %288 = arith.addf %283, %287 : vector<4x64xf32>
    %289 = arith.addf %87, %154 : vector<4x64xf32>
    %290 = arith.addf %221, %288 : vector<4x64xf32>
    %291 = arith.addf %289, %290 : vector<4x64xf32>
    %c0_144 = arith.constant 0 : index
    %c0_145 = arith.constant 0 : index
    %292 = vector.load %arg3[%c0_144, %c0_145] : memref<4x1xf32, #tpu.memory_space<vmem>>, vector<4x1xf32>
    %293 = vector.broadcast %292 : vector<4x1xf32> to vector<4x64xf32>
    %294 = arith.addf %291, %293 : vector<4x64xf32>
    %cst_146 = arith.constant 0.000000e+00 : f32
    %295 = vector.broadcast %cst_146 : f32 to vector<4x64xf32>
    %296 = arith.cmpf oge, %294, %295 : vector<4x64xf32>
    %cst_147 = arith.constant 2.000000e-01 : f32
    %297 = vector.broadcast %cst_147 : f32 to vector<4x64xf32>
    %298 = arith.mulf %294, %297 : vector<4x64xf32>
    %299 = arith.select %296, %294, %298 : vector<4x64xi1>, vector<4x64xf32>
    %c0_148 = arith.constant 0 : index
    %c0_149 = arith.constant 0 : index
    %300 = vector.load %arg4[%c0_148, %c0_149] : memref<4x1xf32, #tpu.memory_space<vmem>>, vector<4x1xf32>
    %301 = vector.broadcast %300 : vector<4x1xf32> to vector<4x64xf32>
    %302 = arith.mulf %299, %301 : vector<4x64xf32>
    %c0_150 = arith.constant 0 : index
    %c0_151 = arith.constant 0 : index
    %303 = vector.load %arg5[%c0_150, %c0_151] : memref<4x1xf32, #tpu.memory_space<vmem>>, vector<4x1xf32>
    %304 = vector.broadcast %303 : vector<4x1xf32> to vector<4x64xf32>
    %305 = arith.addf %302, %304 : vector<4x64xf32>
    %c0_152 = arith.constant 0 : index
    %c0_153 = arith.constant 0 : index
    %c0_154 = arith.constant 0 : index
    %306 = vector.load %arg6[%c0_152, %c0_153, %c0_154] : memref<1x4x64xf32, #tpu.memory_space<vmem>>, vector<1x4x64xf32>
    %307 = vector.shape_cast %306 : vector<1x4x64xf32> to vector<4x64xf32>
    %308 = vector.shape_cast %305 : vector<4x64xf32> to vector<1x4x64xf32>
    tpu.vector_store %arg6[%c0_152, %c0_153, %c0_154], %308 {strides = array<i32>} : memref<1x4x64xf32, #tpu.memory_space<vmem>>, vector<1x4x64xf32>,
    return
  }
  func.func @transform_0(%arg0: i32) -> (i32, i32, i32, i32) {
    %c0_i32 = arith.constant 0 : i32
    %c0_i32_0 = arith.constant 0 : i32
    %c0_i32_1 = arith.constant 0 : i32
    %c0_i32_2 = arith.constant 0 : i32
    return %arg0, %c0_i32, %c0_i32_0, %c0_i32_1 : i32, i32, i32, i32
  }
  func.func @transform_1(%arg0: i32) -> (i32, i32) {
    %c0_i32 = arith.constant 0 : i32
    %c0_i32_0 = arith.constant 0 : i32
    %c0_i32_1 = arith.constant 0 : i32
    return %c0_i32, %c0_i32_0 : i32, i32
  }
  func.func @transform_2(%arg0: i32) -> (i32, i32) {
    %c0_i32 = arith.constant 0 : i32
    %c0_i32_0 = arith.constant 0 : i32
    %c0_i32_1 = arith.constant 0 : i32
    return %c0_i32, %c0_i32_0 : i32, i32
  }
  func.func @transform_3(%arg0: i32) -> (i32, i32) {
    %c0_i32 = arith.constant 0 : i32
    %c0_i32_0 = arith.constant 0 : i32
    %c0_i32_1 = arith.constant 0 : i32
    return %c0_i32, %c0_i32_0 : i32, i32
  }
  func.func @transform_4(%arg0: i32) -> (i32, i32) {
    %c0_i32 = arith.constant 0 : i32
    %c0_i32_0 = arith.constant 0 : i32
    %c0_i32_1 = arith.constant 0 : i32
    return %c0_i32, %c0_i32_0 : i32, i32
  }
  func.func @transform_5(%arg0: i32) -> (i32, i32, i32) {
    %c0_i32 = arith.constant 0 : i32
    %c0_i32_0 = arith.constant 0 : i32
    %c0_i32_1 = arith.constant 0 : i32
    return %arg0, %c0_i32, %c0_i32_0 : i32, i32, i32
  }
}

</mosaic_0001>

<llo_original>
// kernel: basic_block_conv_forward.1
$region0: #{basic_block_conv_forward.1}
  #allocation0 [shape = 'u32[]', space=smem, size = 0x4, offset = 0x4, fixed_abs, tag = 'smem constant byte address 0x4 - core index']
  #allocation1 [shape = 'u32[72,128]{1,0:T(1,128)}', space=vmem, size = 0x9000, scoped, tag = 'internal scratch']
  %s0 = inlined_call_operand.vmem [shape: f32[2,4,4,64], index: 0, kind: input, shape index: {}]
  %s1 = inlined_call_operand.vmem [shape: f32[4,36], index: 1, kind: input, shape index: {}]
  %s2 = inlined_call_operand.vmem [shape: f32[4,1], index: 2, kind: input, shape index: {}]
  %s3 = inlined_call_operand.vmem [shape: f32[4,1], index: 3, kind: input, shape index: {}]
  %s4 = inlined_call_operand.vmem [shape: f32[4,1], index: 4, kind: input, shape index: {}]
  %s5 = inlined_call_operand.vmem [shape: f32[2,4,64], index: 5, kind: output, shape index: {}]
  %s6 = sld [smem:[#allocation0]]
  $region53: #{basic_block_conv_forward.1} parent=0
    _
  %s8 = ssub.s32 1, %s6
  %s9 = scalar_select 0, %s8, %s6
  loop: start=0, step=1, limit=4
  $region2: #{basic_block_conv_forward.1} parent=0 // loop_pre_header
    _
  $region3: #{basic_block_conv_forward.1} parent=0 // loop_header
    %s11 = sphi 0, %s15
    %p12 = scmp.ge.s32.totalorder %s11, 4
    %s21 = sphi 0, %s23
    %s24 = sphi 0, %s21
    %s25 = sphi 0, %s24
    %s41 = sphi 0, %s25
    %s45 = sphi 0, %s45
    %s47 = sphi 0, %s45
    %s48 = sphi 0, %s47
    %s62 = sphi 0, %s48
    %s66 = sphi 0, %s66
    %s68 = sphi 0, %s66
    %s69 = sphi 0, %s68
    %s83 = sphi 0, %s69
    %s87 = sphi 0, %s87
    %s89 = sphi 0, %s87
    %s90 = sphi 0, %s89
    %s104 = sphi 0, %s90
    %s108 = sphi 0, %s108
    %s110 = sphi 0, %s108
    %s111 = sphi 0, %s110
    %s125 = sphi 0, %s111
    %s131 = sphi 0, %s133
    %s134 = sphi 0, %s131
    %s135 = sphi 0, %s134
    %s151 = sphi 0, %s135
  $region4: #{basic_block_conv_forward.1} parent=0 // loop_header_branch
    %14 = sbr.rel (%p12) target = $region8
  $region5: #{basic_block_conv_forward.1} parent=0 // loop_body
    %s16 = ssub.s32 %s11, 1
    %s17 = ssub.s32 %s11, 2
    %s18 = sadd.s32 %s11, 1
    %s19 = ssub.s32 %s11, %s18
    %p20 = scmp.eq.s32.totalorder %s19, 0
    %s22 = sadd.s32 %s21, 1
    %s23 = scalar_select %p20, %s21, %s22
    %p26 = pneg %p20
    %p27 = scmp.eq.s32.totalorder %s11, 1
    %p28 = por %p26, %p27
    %p29 = scmp.ne.s32.totalorder %s21, %s24
    %p30 = scmp.eq.s32.totalorder %s11, 0
    %p31 = por %p29, %p30
    %p32 = scmp.ne.s32.totalorder %s21, %s24
    %p33 = scmp.eq.s32.totalorder %s16, 1
    %p34 = por %p32, %p33
    %p35 = scmp.ne.s32.totalorder %s24, %s25
    %p36 = scmp.eq.s32.totalorder %s16, 0
    %p37 = por %p35, %p36
    %p38 = scmp.ne.s32.totalorder %s24, %s25
    %p39 = scmp.eq.s32.totalorder %s17, 1
    %p40 = por %p38, %p39
    %p42 = scmp.ne.s32.totalorder %s25, %s41
    %p43 = scmp.eq.s32.totalorder %s17, 0
    %p44 = por %p42, %p43
    %s46 = sadd.s32 %s45, 1
    %p49 = scmp.eq.s32.totalorder %s11, 1
    %p50 = scmp.ne.s32.totalorder %s45, %s47
    %p51 = scmp.eq.s32.totalorder %s11, 0
    %p52 = por %p50, %p51
    %p53 = scmp.ne.s32.totalorder %s45, %s47
    %p54 = scmp.eq.s32.totalorder %s16, 1
    %p55 = por %p53, %p54
    %p56 = scmp.ne.s32.totalorder %s47, %s48
    %p57 = scmp.eq.s32.totalorder %s16, 0
    %p58 = por %p56, %p57
    %p59 = scmp.ne.s32.totalorder %s47, %s48
    %p60 = scmp.eq.s32.totalorder %s17, 1
    %p61 = por %p59, %p60
    %p63 = scmp.ne.s32.totalorder %s48, %s62
    %p64 = scmp.eq.s32.totalorder %s17, 0
    %p65 = por %p63, %p64
    %s67 = sadd.s32 %s66, 1
    %p70 = scmp.eq.s32.totalorder %s11, 1
    %p71 = scmp.ne.s32.totalorder %s66, %s68
    %p72 = scmp.eq.s32.totalorder %s11, 0
    %p73 = por %p71, %p72
    %p74 = scmp.ne.s32.totalorder %s66, %s68
    %p75 = scmp.eq.s32.totalorder %s16, 1
    %p76 = por %p74, %p75
    %p77 = scmp.ne.s32.totalorder %s68, %s69
    %p78 = scmp.eq.s32.totalorder %s16, 0
    %p79 = por %p77, %p78
    %p80 = scmp.ne.s32.totalorder %s68, %s69
    %p81 = scmp.eq.s32.totalorder %s17, 1
    %p82 = por %p80, %p81
    %p84 = scmp.ne.s32.totalorder %s69, %s83
    %p85 = scmp.eq.s32.totalorder %s17, 0
    %p86 = por %p84, %p85
    %s88 = sadd.s32 %s87, 1
    %p91 = scmp.eq.s32.totalorder %s11, 1
    %p92 = scmp.ne.s32.totalorder %s87, %s89
    %p93 = scmp.eq.s32.totalorder %s11, 0
    %p94 = por %p92, %p93
    %p95 = scmp.ne.s32.totalorder %s87, %s89
    %p96 = scmp.eq.s32.totalorder %s16, 1
    %p97 = por %p95, %p96
    %p98 = scmp.ne.s32.totalorder %s89, %s90
    %p99 = scmp.eq.s32.totalorder %s16, 0
    %p100 = por %p98, %p99
    %p101 = scmp.ne.s32.totalorder %s89, %s90
    %p102 = scmp.eq.s32.totalorder %s17, 1
    %p103 = por %p101, %p102
    %p105 = scmp.ne.s32.totalorder %s90, %s104
    %p106 = scmp.eq.s32.totalorder %s17, 0
    %p107 = por %p105, %p106
    %s109 = sadd.s32 %s108, 1
    %p112 = scmp.eq.s32.totalorder %s11, 1
    %p113 = scmp.ne.s32.totalorder %s108, %s110
    %p114 = scmp.eq.s32.totalorder %s11, 0
    %p115 = por %p113, %p114
    %p116 = scmp.ne.s32.totalorder %s108, %s110
    %p117 = scmp.eq.s32.totalorder %s16, 1
    %p118 = por %p116, %p117
    %p119 = scmp.ne.s32.totalorder %s110, %s111
    %p120 = scmp.eq.s32.totalorder %s16, 0
    %p121 = por %p119, %p120
    %p122 = scmp.ne.s32.totalorder %s110, %s111
    %p123 = scmp.eq.s32.totalorder %s17, 1
    %p124 = por %p122, %p123
    %p126 = scmp.ne.s32.totalorder %s111, %s125
    %p127 = scmp.eq.s32.totalorder %s17, 0
    %p128 = por %p126, %p127
    %s129 = ssub.s32 %s11, %s18
    %p130 = scmp.eq.s32.totalorder %s129, 0
    %s132 = sadd.s32 %s131, 1
    %s133 = scalar_select %p130, %s131, %s132
    %p136 = pneg %p130
    %p137 = scmp.eq.s32.totalorder %s11, 1
    %p138 = por %p136, %p137
    %p139 = scmp.ne.s32.totalorder %s131, %s134
    %p140 = scmp.eq.s32.totalorder %s11, 0
    %p141 = por %p139, %p140
    %p142 = scmp.ne.s32.totalorder %s131, %s134
    %p143 = scmp.eq.s32.totalorder %s16, 1
    %p144 = por %p142, %p143
    %p145 = scmp.ne.s32.totalorder %s134, %s135
    %p146 = scmp.eq.s32.totalorder %s16, 0
    %p147 = por %p145, %p146
    %p148 = scmp.ne.s32.totalorder %s134, %s135
    %p149 = scmp.eq.s32.totalorder %s17, 1
    %p150 = por %p148, %p149
    %p152 = scmp.ne.s32.totalorder %s135, %s151
    %p153 = scmp.eq.s32.totalorder %s17, 0
    %p154 = por %p152, %p153
    %p155 = scmp.le.s32.totalorder 1, %s11
    %p156 = scmp.lt.s32.totalorder %s11, 3
    %p157 = pnand %p155, %p156
    %p158 = pneg %p157
    // Predicated region
    $region9: #{basic_block_conv_forward.1} parent=5 // pred_check
      _
    $region10: #{basic_block_conv_forward.1} parent=5 // pred_check_branch
      %160 = sbr.rel (%p157) target = $region12
    $region11: #{basic_block_conv_forward.1} parent=5 // pred_region
      %s161 = ssub.s32 %s11, 1
      // Predicated region
      $region13: #{basic_block_conv_forward.1} parent=11 // pred_check
        %p162 = pneg %p58
      $region14: #{basic_block_conv_forward.1} parent=11 // pred_check_branch
        %164 = sbr.rel (%p162) target = $region16
      $region15: #{basic_block_conv_forward.1} parent=11 // pred_region
        _
      $region16: #{basic_block_conv_forward.1} parent=11 // pred_fallthru
        _
      // Predicated region
      $region17: #{basic_block_conv_forward.1} parent=11 // pred_check
        %p165 = pneg %p79
      $region18: #{basic_block_conv_forward.1} parent=11 // pred_check_branch
        %167 = sbr.rel (%p165) target = $region20
      $region19: #{basic_block_conv_forward.1} parent=11 // pred_region
        _
      $region20: #{basic_block_conv_forward.1} parent=11 // pred_fallthru
        _
      // Predicated region
      $region21: #{basic_block_conv_forward.1} parent=11 // pred_check
        %p168 = pneg %p100
      $region22: #{basic_block_conv_forward.1} parent=11 // pred_check_branch
        %170 = sbr.rel (%p168) target = $region24
      $region23: #{basic_block_conv_forward.1} parent=11 // pred_region
        _
      $region24: #{basic_block_conv_forward.1} parent=11 // pred_fallthru
        _
      // Predicated region
      $region25: #{basic_block_conv_forward.1} parent=11 // pred_check
        %p171 = pneg %p121
      $region26: #{basic_block_conv_forward.1} parent=11 // pred_check_branch
        %173 = sbr.rel (%p171) target = $region28
      $region27: #{basic_block_conv_forward.1} parent=11 // pred_region
        _
      $region28: #{basic_block_conv_forward.1} parent=11 // pred_fallthru
        _
    $region12: #{basic_block_conv_forward.1} parent=5 // pred_fallthru
      _
    %p174 = scmp.lt.s32.totalorder %s11, 2
    // Predicated region
    $region29: #{basic_block_conv_forward.1} parent=5 // pred_check
      %p175 = pneg %p174
    $region30: #{basic_block_conv_forward.1} parent=5 // pred_check_branch
      %177 = sbr.rel (%p175) target = $region32
    $region31: #{basic_block_conv_forward.1} parent=5 // pred_region
      // Predicated region
      $region33: #{basic_block_conv_forward.1} parent=31 // pred_check
        %p178 = pneg %p31
      $region34: #{basic_block_conv_forward.1} parent=31 // pred_check_branch
        %180 = sbr.rel (%p178) target = $region36
      $region35: #{basic_block_conv_forward.1} parent=31 // pred_region
        %p181 = scmp.lt.s32.totalorder %s11, 1
        %s182 = scalar_select %p181, %s11, 1
        %s183 = smul.addr %s182, 4
        %s184 = smul.addr %s183, 4
        %s185 = scalar_lea.vmem %s0, %s184
      $region36: #{basic_block_conv_forward.1} parent=31 // pred_fallthru
        _
    $region32: #{basic_block_conv_forward.1} parent=5 // pred_fallthru
      _
    %p186 = scmp.le.s32.totalorder 1, %s11
    %p187 = scmp.lt.s32.totalorder %s11, 3
    %p188 = pnand %p186, %p187
    %p189 = pneg %p188
    // Predicated region
    $region37: #{basic_block_conv_forward.1} parent=5 // pred_check
      _
    $region38: #{basic_block_conv_forward.1} parent=5 // pred_check_branch
      %191 = sbr.rel (%p188) target = $region40
    $region39: #{basic_block_conv_forward.1} parent=5 // pred_region
      %s192 = ssub.s32 %s11, 1
      %p193 = scmp.lt.s32.totalorder %s16, 1
      %s194 = scalar_select %p193, %s16, 1
      %s195 = smul.addr %s194, 4
      %s196 = smul.addr %s195, 4
      %s197 = scalar_lea.vmem %s0, %s196
      %p198 = pneg %p37
      %p199 = pneg %p34
      %p200 = pneg %p58
      %p201 = pneg %p55
      %p202 = pneg %p79
      %p203 = pneg %p76
      %p204 = pneg %p100
      %p205 = pneg %p97
      %p206 = pneg %p121
      %p207 = pneg %p118
      %p208 = pneg %p147
      %p209 = pneg %p144
      %p210 = scmp.lt.s32.totalorder %s16, 1
      %s211 = scalar_select %p210, %s16, 1
      %s212 = smul.addr %s211, 4
      %s213 = scalar_lea.vmem %s5, %s212
      %p214 = scmp.lt.s32.totalorder %s16, 1
      %s215 = scalar_select %p214, %s16, 1
      %s216 = smul.addr %s215, 4
      %s217 = smul.addr %s216, 4
      %s218 = scalar_lea.vmem %s0, %s217
      %p219 = scmp.lt.s32.totalorder %s16, 1
      %s220 = scalar_select %p219, %s16, 1
      %s221 = smul.addr %s220, 4
      %s222 = scalar_lea.vmem %s5, %s221
      %v223 = vlaneseq
      %v224 = vand.u32 %v223, 127
      %vm225 = vcmp.lt.s32.totalorder %v224, 0
      %v226 = vsub.s32 0, %v224
      %v227 = vsel %vm225, %v226, %v224
      %v228 = vshrl.u32 %v227, 3
      %v229 = vand.u32 %v227, 7
      %v230 = vsub.s32 0, %v229
      %v231 = vsel %vm225, %v230, %v229
      %vm232 = vcmp.ne.s32.totalorder %v231, 0
      %vm233 = vcmp.lt.s32.totalorder %v231, 0
      %vm234 = vmand %vm233, %vm232
      %v235 = vadd.s32 %v231, 8
      %v236 = vsel %vm234, %v235, %v231
      %vm237 = vcmp.ge.s32.totalorder %v236, 1
      %vm238 = vcmp.ge.s32.totalorder %v224, 8
      %v239 = vld [vmem:[%s218] sm:$0x1]
      %s240 = scalar_lea.vmem %s218, 4
      %v241 = vld [vmem:[%s240] sm:$0x1]
      %s242 = scalar_lea.vmem %s218, 8
      %v243 = vld [vmem:[%s242] sm:$0x1]
      %s244 = scalar_lea.vmem %s218, 12
      %v245 = vld [vmem:[%s244] sm:$0x1]
      %vm246 = vcmask 1048064
      %247 = vrot.lane.b32.xlu0 %v245, 64
      %v248 = vpop.permute.xlu0 %247
      %v249 = vsel %vm246, %v248, %v245
      %250 = vrot.lane.b32.xlu0 %v249, 64
      %v251 = vpop.permute.xlu0 %250
      %v252 = vsel %vm246, %v251, %v245
      %254 = vrot.lane.b32.xlu0 %v252, 72
      %v255 = vpop.permute.xlu0 %254
      %v257 = vsel %vm238, %v255, 0.0
      %258 = vrot.lane.b32.xlu0 %v257, 64
      %v259 = vpop.permute.xlu0 %258
      %v260 = vsel %vm246, %v259, %v257
      %261 = vrot.lane.b32.xlu0 %v260, 64
      %v262 = vpop.permute.xlu0 %261
      %v263 = vsel %vm246, %v262, %v257
      %265 = vrot.lane.b32.xlu0 %v263, 65
      %v266 = vpop.permute.xlu0 %265
      %v268 = vsel %vm237, %v266, 0.0
      %269 = vrot.lane.b32.xlu0 %v243, 64
      %v270 = vpop.permute.xlu0 %269
      %v271 = vsel %vm246, %v270, %v243
      %272 = vrot.lane.b32.xlu0 %v271, 64
      %v273 = vpop.permute.xlu0 %272
      %v274 = vsel %vm246, %v273, %v243
      %276 = vrot.lane.b32.xlu0 %v274, 72
      %v277 = vpop.permute.xlu0 %276
      %v279 = vsel %vm238, %v277, 0.0
      %280 = vrot.lane.b32.xlu0 %v241, 64
      %v281 = vpop.permute.xlu0 %280
      %v282 = vsel %vm246, %v281, %v241
      %283 = vrot.lane.b32.xlu0 %v282, 64
      %v284 = vpop.permute.xlu0 %283
      %v285 = vsel %vm246, %v284, %v241
      %287 = vrot.lane.b32.xlu0 %v285, 65
      %v288 = vpop.permute.xlu0 %287
      %v290 = vsel %vm237, %v288, 0.0
      %291 = vrot.lane.b32.xlu0 %v252, 65
      %v292 = vpop.permute.xlu0 %291
      %v294 = vsel %vm237, %v292, 0.0
      %v295 = vld [vmem:[%s1] sm:$0xf]
      %297 = vset.pattern.permute.xlu0 0
      %298 = vperm.xlu0 %297, %v295
      %v299 = vpop.permute.xlu0 %298
      %v301 = vperm.slane %v268, 0
      %v302 = vmul.f32 %v299, %v301
      %303 = vset.pattern.permute.xlu0 1
      %304 = vperm.xlu0 %303, %v295
      %v305 = vpop.permute.xlu0 %304
      %v307 = vperm.slane %v279, 0
      %v308 = vmul.f32 %v305, %v307
      %v309 = vadd.f32 %v302, %v308
      %310 = vset.pattern.permute.xlu0 2
      %311 = vperm.xlu0 %310, %v295
      %v312 = vpop.permute.xlu0 %311
      %v314 = vperm.slane %v257, 0
      %v315 = vmul.f32 %v312, %v314
      %v316 = vadd.f32 %v309, %v315
      %317 = vset.pattern.permute.xlu0 3
      %318 = vperm.xlu0 %317, %v295
      %v319 = vpop.permute.xlu0 %318
      %v321 = vperm.slane %v290, 0
      %v322 = vmul.f32 %v319, %v321
      %v323 = vadd.f32 %v316, %v322
      %324 = vset.pattern.permute.xlu0 4
      %325 = vperm.xlu0 %324, %v295
      %v326 = vpop.permute.xlu0 %325
      %v328 = vperm.slane %v239, 0
      %v329 = vmul.f32 %v326, %v328
      %v330 = vadd.f32 %v323, %v329
      %331 = vset.pattern.permute.xlu0 5
      %332 = vperm.xlu0 %331, %v295
      %v333 = vpop.permute.xlu0 %332
      %v335 = vperm.slane %v241, 0
      %v336 = vmul.f32 %v333, %v335
      %v337 = vadd.f32 %v330, %v336
      %338 = vset.pattern.permute.xlu0 6
      %339 = vperm.xlu0 %338, %v295
      %v340 = vpop.permute.xlu0 %339
      %v342 = vperm.slane %v294, 0
      %v343 = vmul.f32 %v340, %v342
      %v344 = vadd.f32 %v337, %v343
      %345 = vset.pattern.permute.xlu0 7
      %346 = vperm.xlu0 %345, %v295
      %v347 = vpop.permute.xlu0 %346
      %v349 = vperm.slane %v243, 0
      %v350 = vmul.f32 %v347, %v349
      %v351 = vadd.f32 %v344, %v350
      %352 = vset.pattern.permute.xlu0 8
      %353 = vperm.xlu0 %352, %v295
      %v354 = vpop.permute.xlu0 %353
      %v356 = vperm.slane %v245, 0
      %v357 = vmul.f32 %v354, %v356
      %v358 = vadd.f32 %v351, %v357
      %v359 = vld [vmem:[%s218 + $0x1] sm:$0x1]
      %v360 = vld [vmem:[%s240 + $0x1] sm:$0x1]
      %v361 = vld [vmem:[%s242 + $0x1] sm:$0x1]
      %v362 = vld [vmem:[%s244 + $0x1] sm:$0x1]
      %363 = vrot.lane.b32.xlu0 %v362, 64
      %v364 = vpop.permute.xlu0 %363
      %v365 = vsel %vm246, %v364, %v362
      %366 = vrot.lane.b32.xlu0 %v365, 64
      %v367 = vpop.permute.xlu0 %366
      %v368 = vsel %vm246, %v367, %v362
      %370 = vrot.lane.b32.xlu0 %v368, 72
      %v371 = vpop.permute.xlu0 %370
      %v373 = vsel %vm238, %v371, 0.0
      %374 = vrot.lane.b32.xlu0 %v373, 64
      %v375 = vpop.permute.xlu0 %374
      %v376 = vsel %vm246, %v375, %v373
      %377 = vrot.lane.b32.xlu0 %v376, 64
      %v378 = vpop.permute.xlu0 %377
      %v379 = vsel %vm246, %v378, %v373
      %381 = vrot.lane.b32.xlu0 %v379, 65
      %v382 = vpop.permute.xlu0 %381
      %v384 = vsel %vm237, %v382, 0.0
      %385 = vrot.lane.b32.xlu0 %v361, 64
      %v386 = vpop.permute.xlu0 %385
      %v387 = vsel %vm246, %v386, %v361
      %388 = vrot.lane.b32.xlu0 %v387, 64
      %v389 = vpop.permute.xlu0 %388
      %v390 = vsel %vm246, %v389, %v361
      %392 = vrot.lane.b32.xlu0 %v390, 72
      %v393 = vpop.permute.xlu0 %392
      %v395 = vsel %vm238, %v393, 0.0
      %396 = vrot.lane.b32.xlu0 %v360, 64
      %v397 = vpop.permute.xlu0 %396
      %v398 = vsel %vm246, %v397, %v360
      %399 = vrot.lane.b32.xlu0 %v398, 64
      %v400 = vpop.permute.xlu0 %399
      %v401 = vsel %vm246, %v400, %v360
      %403 = vrot.lane.b32.xlu0 %v401, 65
      %v404 = vpop.permute.xlu0 %403
      %v406 = vsel %vm237, %v404, 0.0
      %407 = vrot.lane.b32.xlu0 %v368, 65
      %v408 = vpop.permute.xlu0 %407
      %v410 = vsel %vm237, %v408, 0.0
      %411 = vset.pattern.permute.xlu0 9
      %412 = vperm.xlu0 %411, %v295
      %v413 = vpop.permute.xlu0 %412
      %v415 = vperm.slane %v384, 0
      %v416 = vmul.f32 %v413, %v415
      %417 = vset.pattern.permute.xlu0 10
      %418 = vperm.xlu0 %417, %v295
      %v419 = vpop.permute.xlu0 %418
      %v421 = vperm.slane %v395, 0
      %v422 = vmul.f32 %v419, %v421
      %v423 = vadd.f32 %v416, %v422
      %424 = vset.pattern.permute.xlu0 11
      %425 = vperm.xlu0 %424, %v295
      %v426 = vpop.permute.xlu0 %425
      %v428 = vperm.slane %v373, 0
      %v429 = vmul.f32 %v426, %v428
      %v430 = vadd.f32 %v423, %v429
      %431 = vset.pattern.permute.xlu0 12
      %432 = vperm.xlu0 %431, %v295
      %v433 = vpop.permute.xlu0 %432
      %v435 = vperm.slane %v406, 0
      %v436 = vmul.f32 %v433, %v435
      %v437 = vadd.f32 %v430, %v436
      %438 = vset.pattern.permute.xlu0 13
      %439 = vperm.xlu0 %438, %v295
      %v440 = vpop.permute.xlu0 %439
      %v442 = vperm.slane %v359, 0
      %v443 = vmul.f32 %v440, %v442
      %v444 = vadd.f32 %v437, %v443
      %445 = vset.pattern.permute.xlu0 14
      %446 = vperm.xlu0 %445, %v295
      %v447 = vpop.permute.xlu0 %446
      %v449 = vperm.slane %v360, 0
      %v450 = vmul.f32 %v447, %v449
      %v451 = vadd.f32 %v444, %v450
      %452 = vset.pattern.permute.xlu0 15
      %453 = vperm.xlu0 %452, %v295
      %v454 = vpop.permute.xlu0 %453
      %v456 = vperm.slane %v410, 0
      %v457 = vmul.f32 %v454, %v456
      %v458 = vadd.f32 %v451, %v457
      %459 = vset.pattern.permute.xlu0 16
      %460 = vperm.xlu0 %459, %v295
      %v461 = vpop.permute.xlu0 %460
      %v463 = vperm.slane %v361, 0
      %v464 = vmul.f32 %v461, %v463
      %v465 = vadd.f32 %v458, %v464
      %466 = vset.pattern.permute.xlu0 17
      %467 = vperm.xlu0 %466, %v295
      %v468 = vpop.permute.xlu0 %467
      %v470 = vperm.slane %v362, 0
      %v471 = vmul.f32 %v468, %v470
      %v472 = vadd.f32 %v465, %v471
      %v473 = vld [vmem:[%s218 + $0x2] sm:$0x1]
      %v474 = vld [vmem:[%s240 + $0x2] sm:$0x1]
      %v475 = vld [vmem:[%s242 + $0x2] sm:$0x1]
      %v476 = vld [vmem:[%s244 + $0x2] sm:$0x1]
      %477 = vrot.lane.b32.xlu0 %v476, 64
      %v478 = vpop.permute.xlu0 %477
      %v479 = vsel %vm246, %v478, %v476
      %480 = vrot.lane.b32.xlu0 %v479, 64
      %v481 = vpop.permute.xlu0 %480
      %v482 = vsel %vm246, %v481, %v476
      %484 = vrot.lane.b32.xlu0 %v482, 72
      %v485 = vpop.permute.xlu0 %484
      %v487 = vsel %vm238, %v485, 0.0
      %488 = vrot.lane.b32.xlu0 %v487, 64
      %v489 = vpop.permute.xlu0 %488
      %v490 = vsel %vm246, %v489, %v487
      %491 = vrot.lane.b32.xlu0 %v490, 64
      %v492 = vpop.permute.xlu0 %491
      %v493 = vsel %vm246, %v492, %v487
      %495 = vrot.lane.b32.xlu0 %v493, 65
      %v496 = vpop.permute.xlu0 %495
      %v498 = vsel %vm237, %v496, 0.0
      %499 = vrot.lane.b32.xlu0 %v475, 64
      %v500 = vpop.permute.xlu0 %499
      %v501 = vsel %vm246, %v500, %v475
      %502 = vrot.lane.b32.xlu0 %v501, 64
      %v503 = vpop.permute.xlu0 %502
      %v504 = vsel %vm246, %v503, %v475
      %506 = vrot.lane.b32.xlu0 %v504, 72
      %v507 = vpop.permute.xlu0 %506
      %v509 = vsel %vm238, %v507, 0.0
      %510 = vrot.lane.b32.xlu0 %v474, 64
      %v511 = vpop.permute.xlu0 %510
      %v512 = vsel %vm246, %v511, %v474
      %513 = vrot.lane.b32.xlu0 %v512, 64
      %v514 = vpop.permute.xlu0 %513
      %v515 = vsel %vm246, %v514, %v474
      %517 = vrot.lane.b32.xlu0 %v515, 65
      %v518 = vpop.permute.xlu0 %517
      %v520 = vsel %vm237, %v518, 0.0
      %521 = vrot.lane.b32.xlu0 %v482, 65
      %v522 = vpop.permute.xlu0 %521
      %v524 = vsel %vm237, %v522, 0.0
      %525 = vset.pattern.permute.xlu0 18
      %526 = vperm.xlu0 %525, %v295
      %v527 = vpop.permute.xlu0 %526
      %v529 = vperm.slane %v498, 0
      %v530 = vmul.f32 %v527, %v529
      %531 = vset.pattern.permute.xlu0 19
      %532 = vperm.xlu0 %531, %v295
      %v533 = vpop.permute.xlu0 %532
      %v535 = vperm.slane %v509, 0
      %v536 = vmul.f32 %v533, %v535
      %v537 = vadd.f32 %v530, %v536
      %538 = vset.pattern.permute.xlu0 20
      %539 = vperm.xlu0 %538, %v295
      %v540 = vpop.permute.xlu0 %539
      %v542 = vperm.slane %v487, 0
      %v543 = vmul.f32 %v540, %v542
      %v544 = vadd.f32 %v537, %v543
      %545 = vset.pattern.permute.xlu0 21
      %546 = vperm.xlu0 %545, %v295
      %v547 = vpop.permute.xlu0 %546
      %v549 = vperm.slane %v520, 0
      %v550 = vmul.f32 %v547, %v549
      %v551 = vadd.f32 %v544, %v550
      %552 = vset.pattern.permute.xlu0 22
      %553 = vperm.xlu0 %552, %v295
      %v554 = vpop.permute.xlu0 %553
      %v556 = vperm.slane %v473, 0
      %v557 = vmul.f32 %v554, %v556
      %v558 = vadd.f32 %v551, %v557
      %559 = vset.pattern.permute.xlu0 23
      %560 = vperm.xlu0 %559, %v295
      %v561 = vpop.permute.xlu0 %560
      %v563 = vperm.slane %v474, 0
      %v564 = vmul.f32 %v561, %v563
      %v565 = vadd.f32 %v558, %v564
      %566 = vset.pattern.permute.xlu0 24
      %567 = vperm.xlu0 %566, %v295
      %v568 = vpop.permute.xlu0 %567
      %v570 = vperm.slane %v524, 0
      %v571 = vmul.f32 %v568, %v570
      %v572 = vadd.f32 %v565, %v571
      %573 = vset.pattern.permute.xlu0 25
      %574 = vperm.xlu0 %573, %v295
      %v575 = vpop.permute.xlu0 %574
      %v577 = vperm.slane %v475, 0
      %v578 = vmul.f32 %v575, %v577
      %v579 = vadd.f32 %v572, %v578
      %580 = vset.pattern.permute.xlu0 26
      %581 = vperm.xlu0 %580, %v295
      %v582 = vpop.permute.xlu0 %581
      %v584 = vperm.slane %v476, 0
      %v585 = vmul.f32 %v582, %v584
      %v586 = vadd.f32 %v579, %v585
      %v587 = vld [vmem:[%s218 + $0x3] sm:$0x1]
      %v588 = vld [vmem:[%s240 + $0x3] sm:$0x1]
      %v589 = vld [vmem:[%s242 + $0x3] sm:$0x1]
      %v590 = vld [vmem:[%s244 + $0x3] sm:$0x1]
      %591 = vrot.lane.b32.xlu0 %v590, 64
      %v592 = vpop.permute.xlu0 %591
      %v593 = vsel %vm246, %v592, %v590
      %594 = vrot.lane.b32.xlu0 %v593, 64
      %v595 = vpop.permute.xlu0 %594
      %v596 = vsel %vm246, %v595, %v590
      %598 = vrot.lane.b32.xlu0 %v596, 72
      %v599 = vpop.permute.xlu0 %598
      %v601 = vsel %vm238, %v599, 0.0
      %602 = vrot.lane.b32.xlu0 %v601, 64
      %v603 = vpop.permute.xlu0 %602
      %v604 = vsel %vm246, %v603, %v601
      %605 = vrot.lane.b32.xlu0 %v604, 64
      %v606 = vpop.permute.xlu0 %605
      %v607 = vsel %vm246, %v606, %v601
      %609 = vrot.lane.b32.xlu0 %v607, 65
      %v610 = vpop.permute.xlu0 %609
      %v612 = vsel %vm237, %v610, 0.0
      %613 = vrot.lane.b32.xlu0 %v589, 64
      %v614 = vpop.permute.xlu0 %613
      %v615 = vsel %vm246, %v614, %v589
      %616 = vrot.lane.b32.xlu0 %v615, 64
      %v617 = vpop.permute.xlu0 %616
      %v618 = vsel %vm246, %v617, %v589
      %620 = vrot.lane.b32.xlu0 %v618, 72
      %v621 = vpop.permute.xlu0 %620
      %v623 = vsel %vm238, %v621, 0.0
      %624 = vrot.lane.b32.xlu0 %v588, 64
      %v625 = vpop.permute.xlu0 %624
      %v626 = vsel %vm246, %v625, %v588
      %627 = vrot.lane.b32.xlu0 %v626, 64
      %v628 = vpop.permute.xlu0 %627
      %v629 = vsel %vm246, %v628, %v588
      %631 = vrot.lane.b32.xlu0 %v629, 65
      %v632 = vpop.permute.xlu0 %631
      %v634 = vsel %vm237, %v632, 0.0
      %635 = vrot.lane.b32.xlu0 %v596, 65
      %v636 = vpop.permute.xlu0 %635
      %v638 = vsel %vm237, %v636, 0.0
      %639 = vset.pattern.permute.xlu0 27
      %640 = vperm.xlu0 %639, %v295
      %v641 = vpop.permute.xlu0 %640
      %v643 = vperm.slane %v612, 0
      %v644 = vmul.f32 %v641, %v643
      %645 = vset.pattern.permute.xlu0 28
      %646 = vperm.xlu0 %645, %v295
      %v647 = vpop.permute.xlu0 %646
      %v649 = vperm.slane %v623, 0
      %v650 = vmul.f32 %v647, %v649
      %v651 = vadd.f32 %v644, %v650
      %652 = vset.pattern.permute.xlu0 29
      %653 = vperm.xlu0 %652, %v295
      %v654 = vpop.permute.xlu0 %653
      %v656 = vperm.slane %v601, 0
      %v657 = vmul.f32 %v654, %v656
      %v658 = vadd.f32 %v651, %v657
      %659 = vset.pattern.permute.xlu0 30
      %660 = vperm.xlu0 %659, %v295
      %v661 = vpop.permute.xlu0 %660
      %v663 = vperm.slane %v634, 0
      %v664 = vmul.f32 %v661, %v663
      %v665 = vadd.f32 %v658, %v664
      %666 = vset.pattern.permute.xlu0 31
      %667 = vperm.xlu0 %666, %v295
      %v668 = vpop.permute.xlu0 %667
      %v670 = vperm.slane %v587, 0
      %v671 = vmul.f32 %v668, %v670
      %v672 = vadd.f32 %v665, %v671
      %673 = vset.pattern.permute.xlu0 32
      %674 = vperm.xlu0 %673, %v295
      %v675 = vpop.permute.xlu0 %674
      %v677 = vperm.slane %v588, 0
      %v678 = vmul.f32 %v675, %v677
      %v679 = vadd.f32 %v672, %v678
      %680 = vset.pattern.permute.xlu0 33
      %681 = vperm.xlu0 %680, %v295
      %v682 = vpop.permute.xlu0 %681
      %v684 = vperm.slane %v638, 0
      %v685 = vmul.f32 %v682, %v684
      %v686 = vadd.f32 %v679, %v685
      %687 = vset.pattern.permute.xlu0 34
      %688 = vperm.xlu0 %687, %v295
      %v689 = vpop.permute.xlu0 %688
      %v691 = vperm.slane %v589, 0
      %v692 = vmul.f32 %v689, %v691
      %v693 = vadd.f32 %v686, %v692
      %694 = vset.pattern.permute.xlu0 35
      %695 = vperm.xlu0 %694, %v295
      %v696 = vpop.permute.xlu0 %695
      %v698 = vperm.slane %v590, 0
      %v699 = vmul.f32 %v696, %v698
      %v700 = vadd.f32 %v693, %v699
      %v701 = vadd.f32 %v358, %v472
      %v702 = vadd.f32 %v586, %v700
      %v703 = vadd.f32 %v701, %v702
      %v704 = vld [vmem:[%s2] sm:$0xf]
      %706 = vset.pattern.permute.xlu0 0
      %707 = vperm.xlu0 %706, %v704
      %v708 = vpop.permute.xlu0 %707
      %v710 = vadd.f32 %v703, %v708
      %vm711 = vcmp.ge.f32.partialorder %v710, 0.0
      %v712 = vmul.f32 %v710, 0.2
      %v713 = vsel %vm711, %v710, %v712
      %v714 = vld [vmem:[%s3] sm:$0xf]
      %716 = vset.pattern.permute.xlu0 0
      %717 = vperm.xlu0 %716, %v714
      %v718 = vpop.permute.xlu0 %717
      %v720 = vmul.f32 %v713, %v718
      %v721 = vld [vmem:[%s4] sm:$0xf]
      %723 = vset.pattern.permute.xlu0 0
      %724 = vperm.xlu0 %723, %v721
      %v725 = vpop.permute.xlu0 %724
      %v727 = vadd.f32 %v720, %v725
      %vm728 = vcmask 519168
      %729 = vst.msk [vmem:[%s222] sm:$0xf] %vm728, %v727
      %p730 = scmp.lt.s32.totalorder %s16, 1
      %s731 = scalar_select %p730, %s16, 1
      %s732 = smul.addr %s731, 4
      %s733 = scalar_lea.vmem %s5, %s732
      // Predicated region
      $region41: #{basic_block_conv_forward.1} parent=39 // pred_check
        %p734 = pneg %p144
      $region42: #{basic_block_conv_forward.1} parent=39 // pred_check_branch
        %736 = sbr.rel (%p734) target = $region44
      $region43: #{basic_block_conv_forward.1} parent=39 // pred_region
        _
      $region44: #{basic_block_conv_forward.1} parent=39 // pred_fallthru
        _
    $region40: #{basic_block_conv_forward.1} parent=5 // pred_fallthru
      _
    %p737 = scmp.le.s32.totalorder 2, %s11
    // Predicated region
    $region45: #{basic_block_conv_forward.1} parent=5 // pred_check
      %p738 = pneg %p737
    $region46: #{basic_block_conv_forward.1} parent=5 // pred_check_branch
      %740 = sbr.rel (%p738) target = $region48
    $region47: #{basic_block_conv_forward.1} parent=5 // pred_region
      %s741 = ssub.s32 %s11, 2
      // Predicated region
      $region49: #{basic_block_conv_forward.1} parent=47 // pred_check
        %p742 = pneg %p150
      $region50: #{basic_block_conv_forward.1} parent=47 // pred_check_branch
        %744 = sbr.rel (%p742) target = $region52
      $region51: #{basic_block_conv_forward.1} parent=47 // pred_region
        %p745 = scmp.lt.s32.totalorder %s17, 1
        %s746 = scalar_select %p745, %s17, 1
        %s747 = smul.addr %s746, 4
        %s748 = scalar_lea.vmem %s5, %s747
      $region52: #{basic_block_conv_forward.1} parent=47 // pred_fallthru
        _
    $region48: #{basic_block_conv_forward.1} parent=5 // pred_fallthru
      _
  $region6: #{basic_block_conv_forward.1} parent=0 // loop_footer
    %s15 = sadd.s32 1, %s11
  $region7: #{basic_block_conv_forward.1} parent=0 // loop_footer_branch
    %10 = sbr.rel target = $region3
  $region8: #{basic_block_conv_forward.1} parent=0 // loop_exit
    _

</llo_original>
